<compile_context>
chip_gen: v6e
topology: v6e:2x2x1
jax: 0.10.0
libtpu: 0.0.40
codegen_flags: <defaults>
</compile_context>

<pallas_src>
import functools

import numpy as np
import jax
import jax.numpy as jnp
from jax.experimental import pallas as pl
from jax.experimental.pallas import tpu as pltpu


# ---------------------------------------------------------------------------
# Pallas kernel: one batch element per grid step, fully fused attention.
# ---------------------------------------------------------------------------
def _mha_kernel(x_ref, g_ref, b_ref, wq_ref, wk_ref, wv_ref, wo_ref, bo_ref,
                o_ref, xn_s, y_acc, *, num_head, dim_head, eps, scale):
    # Per grid step (batch dim squeezed):
    #   x_ref : (N, D)                 g_ref / b_ref / bo_ref : (1, D)
    #   wq/wk/wv_ref : (H, D, dh) bf16  wo_ref : (H, dh, D) bf16
    #   o_ref : (N, D)
    #   xn_s  : VMEM (N, D) bf16 scratch (normalized activations, MXU operand)
    #   y_acc : VMEM (N, D) f32 scratch (fused output-projection accumulator)
    x = x_ref[...].astype(jnp.float32)

    # LayerNorm (biased variance, eps matches nn.LayerNorm default)
    mean = jnp.mean(x, axis=-1, keepdims=True)
    xc = x - mean
    var = jnp.mean(xc * xc, axis=-1, keepdims=True)
    xn = xc * jax.lax.rsqrt(var + eps)
    xn = xn * g_ref[...].astype(jnp.float32) + b_ref[...].astype(jnp.float32)

    xn_s[...] = xn.astype(jnp.bfloat16)          # bf16 MXU operand, lives in VMEM
    y_acc[...] = jnp.zeros_like(y_acc)

    def head_body(h, carry):
        xb = xn_s[...]                                           # (N, D) bf16
        # Per-head QKV projections: leading-axis index into head-major weights
        # (no lane-offset slicing), bf16 MXU feed, f32 accumulation.
        q = jnp.dot(xb, wq_ref[h], preferred_element_type=jnp.float32)   # (N, dh)
        k = jnp.dot(xb, wk_ref[h], preferred_element_type=jnp.float32)   # (N, dh)
        v = jnp.dot(xb, wv_ref[h], preferred_element_type=jnp.float32)   # (N, dh)

        qb = (q * scale).astype(jnp.bfloat16)     # scale on (N, dh), not (N, N)
        kb = k.astype(jnp.bfloat16)
        vb = v.astype(jnp.bfloat16)

        # scores = q @ k^T : contract dim 1 of both operands (no transpose op)
        s = jax.lax.dot_general(
            qb, kb, (((1,), (1,)), ((), ())),
            preferred_element_type=jnp.float32)                  # (N, N) f32

        m = jnp.max(s, axis=-1, keepdims=True)
        p = jnp.exp(s - m)                                       # unnormalized
        rowsum = jnp.sum(p, axis=-1, keepdims=True)              # (N, 1)

        # PV with unnormalized probabilities, then deferred normalization of
        # the (N, dh) result via the EUP approximate reciprocal.
        pv = jnp.dot(p.astype(jnp.bfloat16), vb,
                     preferred_element_type=jnp.float32)         # (N, dh)
        oh = pv * pl.reciprocal(rowsum, approx=True)

        # Output projection fused into the head loop.
        y_acc[...] += jnp.dot(oh.astype(jnp.bfloat16), wo_ref[h],
                              preferred_element_type=jnp.float32)
        return carry

    jax.lax.fori_loop(0, num_head, head_body, 0)

    o_ref[...] = (y_acc[...] + bo_ref[...].astype(jnp.float32)).astype(o_ref.dtype)


def mha_pallas(x, gamma, beta, wq_hd, wk_hd, wv_hd, wo_hd, bias,
               *, num_head, dim_head, eps=1e-5):
    """x: (B, N, D). Weights head-major bf16: wq/wk/wv (H, D, dh), wo (H, dh, D)."""
    B, N, D = x.shape
    hidden = num_head * dim_head
    assert wq_hd.shape == (num_head, D, dim_head)
    assert wo_hd.shape == (num_head, dim_head, D)

    kernel = functools.partial(
        _mha_kernel, num_head=num_head, dim_head=dim_head, eps=eps,
        scale=dim_head ** (-0.5))

    # Cost estimate (per full call).
    flops = B * (6 * N * D * hidden + 4 * N * N * hidden + 2 * N * hidden * D)
    transcendentals = B * num_head * (N * N + N)
    bytes_accessed = (2 * B * N * D * x.dtype.itemsize
                      + (3 * D * hidden + hidden * D) * 2 + 4 * D * 4)

    # Explicit VMEM budget: weights (double-buffered, bf16) + x/y blocks
    # (double-buffered) + scratch + per-head transients (scores etc.),
    # with 1.5x + 4 MiB headroom; never below the 32 MiB default scoped
    # limit, capped at 64 MiB so it stays valid on v7x.
    w_bytes = 2 * (3 * D * hidden + hidden * D) * 2
    io_bytes = 2 * 2 * N * D * x.dtype.itemsize
    scratch_bytes = N * D * (2 + 4)
    transient_bytes = 3 * N * N * 4 + 8 * N * max(dim_head, 128) * 4
    est = int(1.5 * (w_bytes + io_bytes + scratch_bytes + transient_bytes)) + (4 << 20)
    vmem_limit = int(min(max(est, 32 << 20), 64 << 20))

    return pl.pallas_call(
        kernel,
        out_shape=jax.ShapeDtypeStruct((B, N, D), x.dtype),
        grid_spec=pltpu.PrefetchScalarGridSpec(
            num_scalar_prefetch=0,
            grid=(B,),
            in_specs=[
                pl.BlockSpec((pl.Squeezed(), N, D), lambda b: (b, 0, 0)),       # x
                pl.BlockSpec((1, D), lambda b: (0, 0)),                         # gamma
                pl.BlockSpec((1, D), lambda b: (0, 0)),                         # beta
                pl.BlockSpec((num_head, D, dim_head), lambda b: (0, 0, 0)),     # Wq (H,D,dh)
                pl.BlockSpec((num_head, D, dim_head), lambda b: (0, 0, 0)),     # Wk (H,D,dh)
                pl.BlockSpec((num_head, D, dim_head), lambda b: (0, 0, 0)),     # Wv (H,D,dh)
                pl.BlockSpec((num_head, dim_head, D), lambda b: (0, 0, 0)),     # Wo (H,dh,D)
                pl.BlockSpec((1, D), lambda b: (0, 0)),                         # bias
            ],
            out_specs=pl.BlockSpec((pl.Squeezed(), N, D), lambda b: (b, 0, 0)),
            scratch_shapes=[
                pltpu.VMEM((N, D), jnp.bfloat16),    # xn (bf16 MXU operand)
                pltpu.VMEM((N, D), jnp.float32),     # fused output accumulator
            ],
        ),
        compiler_params=pltpu.CompilerParams(
            dimension_semantics=("parallel",),
            vmem_limit_bytes=vmem_limit),
        cost_estimate=pl.CostEstimate(
            flops=flops, transcendentals=transcendentals,
            bytes_accessed=bytes_accessed),
    )(x, gamma, beta, wq_hd, wk_hd, wv_hd, wo_hd, bias)


# ---------------------------------------------------------------------------
# Module-equivalent wrapper (holds parameters, mirrors Attention.forward).
# ---------------------------------------------------------------------------
class AttentionPallas:
    def __init__(self, dim, num_head=8, dim_head=64, dropout=0.0, key=None):
        self.dim = dim
        self.num_head = num_head
        self.dim_head = dim_head
        hidden = num_head * dim_head
        # dropout == 0.0 in this configuration -> identity (see TODO in kernel)
        if key is None:
            key = jax.random.PRNGKey(0)
        kq, kk, kv, ko, kb = jax.random.split(key, 5)
        self.gamma = jnp.ones((1, dim), jnp.float32)
        self.beta = jnp.zeros((1, dim), jnp.float32)

        def head_major(w_t):  # (D, H*dh) -> (H, D, dh)
            return w_t.reshape(dim, num_head, dim_head).transpose(1, 0, 2)

        wq_t = jax.random.normal(kq, (dim, hidden), jnp.float32) / np.sqrt(dim)
        wk_t = jax.random.normal(kk, (dim, hidden), jnp.float32) / np.sqrt(dim)
        wv_t = jax.random.normal(kv, (dim, hidden), jnp.float32) / np.sqrt(dim)
        wo_t = jax.random.normal(ko, (hidden, dim), jnp.float32) / np.sqrt(hidden)

        # Stored head-major and pre-cast to bf16 once (MXU-native operands).
        self.wq_hd = head_major(wq_t).astype(jnp.bfloat16)            # (H, D, dh)
        self.wk_hd = head_major(wk_t).astype(jnp.bfloat16)            # (H, D, dh)
        self.wv_hd = head_major(wv_t).astype(jnp.bfloat16)            # (H, D, dh)
        self.wo_hd = wo_t.reshape(num_head, dim_head, dim).astype(jnp.bfloat16)  # (H, dh, D)
        self.bias = jax.random.normal(kb, (1, dim), jnp.float32) * 0.02

    def __call__(self, x):
        return mha_pallas(x, self.gamma, self.beta,
                          self.wq_hd, self.wk_hd, self.wv_hd, self.wo_hd,
                          self.bias,
                          num_head=self.num_head, dim_head=self.dim_head)


# ---------------------------------------------------------------------------
# Pure-JAX reference (HIGHEST precision) using the same (bf16-rounded) weights,
# so the check isolates the kernel's in-flight bf16/softmax approximations.
# ---------------------------------------------------------------------------
def attention_ref(x, m: AttentionPallas, eps=1e-5):
    hp = jax.lax.Precision.HIGHEST
    wq = m.wq_hd.astype(jnp.float32)   # (H, D, dh)
    wk = m.wk_hd.astype(jnp.float32)
    wv = m.wv_hd.astype(jnp.float32)
    wo = m.wo_hd.astype(jnp.float32)   # (H, dh, D)
    mean = jnp.mean(x, -1, keepdims=True)
    var = jnp.mean((x - mean) ** 2, -1, keepdims=True)
    xn = (x - mean) * jax.lax.rsqrt(var + eps) * m.gamma[0] + m.beta[0]
    q = jnp.einsum("bnd,hde->bhne", xn, wq, precision=hp)
    k = jnp.einsum("bnd,hde->bhne", xn, wk, precision=hp)
    v = jnp.einsum("bnd,hde->bhne", xn, wv, precision=hp)
    s = jnp.einsum("bhne,bhme->bhnm", q, k, precision=hp) * m.dim_head ** (-0.5)
    attn = jax.nn.softmax(s, axis=-1)
    o = jnp.einsum("bhnm,bhme->bhne", attn, v, precision=hp)
    return jnp.einsum("bhne,hed->bnd", o, wo, precision=hp) + m.bias[0]


if __name__ == "__main__":
    # Small shapes consistent with the module: batch=2, seq=16, dim=32,
    # num_head=4, dim_head=16  (hidden = 64).
    B, N, dim = 2, 16, 32
    num_head, dim_head = 4, 16

    key = jax.random.PRNGKey(0)
    kx, kp = jax.random.split(key)
    x = jax.random.normal(kx, (B, N, dim), dtype=jnp.float32)

    mod = AttentionPallas(dim, num_head=num_head, dim_head=dim_head, key=kp)

    out = jax.block_until_ready(mod(x))

    ref = attention_ref(x, mod)
    # tolerance widened for bf16 MXU feeds + deferred-softmax approx reciprocal
    np.testing.assert_allclose(np.asarray(out), np.asarray(ref),
                               rtol=5e-2, atol=5e-2)

    print("KERNEL_OK")
</pallas_src>

<mosaic_0001>
module attributes {stable_mosaic.version = 11 : i64} {
  func.func @_mha_kernel(%arg0: i32, %arg1: memref<1x16x32xf32, #tpu.memory_space<vmem>>, %arg2: memref<1x32xf32, #tpu.memory_space<vmem>>, %arg3: memref<1x32xf32, #tpu.memory_space<vmem>>, %arg4: memref<4x32x16xbf16, #tpu.memory_space<vmem>>, %arg5: memref<4x32x16xbf16, #tpu.memory_space<vmem>>, %arg6: memref<4x32x16xbf16, #tpu.memory_space<vmem>>, %arg7: memref<4x16x32xbf16, #tpu.memory_space<vmem>>, %arg8: memref<1x32xf32, #tpu.memory_space<vmem>>, %arg9: memref<1x16x32xf32, #tpu.memory_space<vmem>>, %arg10: memref<16x32xbf16, #tpu.memory_space<vmem>>, %arg11: memref<16x32xf32, #tpu.memory_space<vmem>>) attributes {dimension_semantics = [#tpu.dimension_semantics<parallel>], iteration_bounds = array<i64: 2>, scalar_prefetch = 0 : i64, scratch_operands = 2 : i64, tpu.core_type = #tpu.core_type<tc>, window_params = [{transform_indices = @transform_0, window_bounds = array<i64: 1, 16, 32>}, {pipeline_mode = #tpu.pipeline_mode<synchronous>, transform_indices = @transform_1, window_bounds = array<i64: 1, 32>}, {pipeline_mode = #tpu.pipeline_mode<synchronous>, transform_indices = @transform_2, window_bounds = array<i64: 1, 32>}, {pipeline_mode = #tpu.pipeline_mode<synchronous>, transform_indices = @transform_3, window_bounds = array<i64: 4, 32, 16>}, {pipeline_mode = #tpu.pipeline_mode<synchronous>, transform_indices = @transform_4, window_bounds = array<i64: 4, 32, 16>}, {pipeline_mode = #tpu.pipeline_mode<synchronous>, transform_indices = @transform_5, window_bounds = array<i64: 4, 32, 16>}, {pipeline_mode = #tpu.pipeline_mode<synchronous>, transform_indices = @transform_6, window_bounds = array<i64: 4, 16, 32>}, {pipeline_mode = #tpu.pipeline_mode<synchronous>, transform_indices = @transform_7, window_bounds = array<i64: 1, 32>}, {transform_indices = @transform_8, window_bounds = array<i64: 1, 16, 32>}]} {
    %c0 = arith.constant 0 : index
    %c0_0 = arith.constant 0 : index
    %c0_1 = arith.constant 0 : index
    %0 = vector.load %arg1[%c0, %c0_0, %c0_1] : memref<1x16x32xf32, #tpu.memory_space<vmem>>, vector<1x16x32xf32>
    %1 = vector.shape_cast %0 : vector<1x16x32xf32> to vector<16x32xf32>
    %cst = arith.constant dense<0.000000e+00> : vector<16xf32>
    %2 = vector.multi_reduction <add>, %1, %cst [1] : vector<16x32xf32> to vector<16xf32>
    %3 = vector.shape_cast %2 : vector<16xf32> to vector<16x1xf32>
    %cst_2 = arith.constant 3.200000e+01 : f32
    %4 = vector.broadcast %cst_2 : f32 to vector<16x1xf32>
    %5 = arith.divf %3, %4 : vector<16x1xf32>
    %6 = vector.broadcast %5 : vector<16x1xf32> to vector<16x32xf32>
    %7 = arith.subf %1, %6 : vector<16x32xf32>
    %8 = arith.mulf %7, %7 : vector<16x32xf32>
    %cst_3 = arith.constant dense<0.000000e+00> : vector<16xf32>
    %9 = vector.multi_reduction <add>, %8, %cst_3 [1] : vector<16x32xf32> to vector<16xf32>
    %10 = vector.shape_cast %9 : vector<16xf32> to vector<16x1xf32>
    %cst_4 = arith.constant 3.200000e+01 : f32
    %11 = vector.broadcast %cst_4 : f32 to vector<16x1xf32>
    %12 = arith.divf %10, %11 : vector<16x1xf32>
    %cst_5 = arith.constant 9.99999974E-6 : f32
    %13 = vector.broadcast %cst_5 : f32 to vector<16x1xf32>
    %14 = arith.addf %12, %13 : vector<16x1xf32>
    %15 = math.rsqrt %14 : vector<16x1xf32>
    %16 = vector.broadcast %15 : vector<16x1xf32> to vector<16x32xf32>
    %17 = arith.mulf %7, %16 : vector<16x32xf32>
    %c0_6 = arith.constant 0 : index
    %c0_7 = arith.constant 0 : index
    %18 = vector.load %arg2[%c0_6, %c0_7] : memref<1x32xf32, #tpu.memory_space<vmem>>, vector<1x32xf32>
    %19 = vector.broadcast %18 : vector<1x32xf32> to vector<16x32xf32>
    %20 = arith.mulf %17, %19 : vector<16x32xf32>
    %c0_8 = arith.constant 0 : index
    %c0_9 = arith.constant 0 : index
    %21 = vector.load %arg3[%c0_8, %c0_9] : memref<1x32xf32, #tpu.memory_space<vmem>>, vector<1x32xf32>
    %22 = vector.broadcast %21 : vector<1x32xf32> to vector<16x32xf32>
    %23 = arith.addf %20, %22 : vector<16x32xf32>
    %24 = arith.truncf %23 : vector<16x32xf32> to vector<16x32xbf16>
    %c0_10 = arith.constant 0 : index
    %c0_11 = arith.constant 0 : index
    %25 = vector.load %arg10[%c0_10, %c0_11] : memref<16x32xbf16, #tpu.memory_space<vmem>>, vector<16x32xbf16>
    tpu.vector_store %arg10[%c0_10, %c0_11], %24 {strides = array<i32>} : memref<16x32xbf16, #tpu.memory_space<vmem>>, vector<16x32xbf16>,
    %cst_12 = arith.constant 0.000000e+00 : f32
    %26 = vector.broadcast %cst_12 : f32 to vector<16x32xf32>
    %c0_13 = arith.constant 0 : index
    %c0_14 = arith.constant 0 : index
    %27 = vector.load %arg11[%c0_13, %c0_14] : memref<16x32xf32, #tpu.memory_space<vmem>>, vector<16x32xf32>
    tpu.vector_store %arg11[%c0_13, %c0_14], %26 {strides = array<i32>} : memref<16x32xf32, #tpu.memory_space<vmem>>, vector<16x32xf32>,
    %c0_i32 = arith.constant 0 : i32
    %c4_i32 = arith.constant 4 : i32
    %28 = arith.addi %c0_i32, %c4_i32 : i32
    %c1_i32 = arith.constant 1 : i32
    scf.for %arg12 = %c0_i32 to %28 step %c1_i32  : i32 {
      %c0_23 = arith.constant 0 : index
      %c0_24 = arith.constant 0 : index
      %36 = vector.load %arg10[%c0_23, %c0_24] : memref<16x32xbf16, #tpu.memory_space<vmem>>, vector<16x32xbf16>
      %37 = arith.index_cast %arg12 : i32 to index
      %c0_25 = arith.constant 0 : index
      %c0_26 = arith.constant 0 : index
      %38 = vector.load %arg4[%37, %c0_25, %c0_26] : memref<4x32x16xbf16, #tpu.memory_space<vmem>>, vector<1x32x16xbf16>
      %39 = vector.shape_cast %38 : vector<1x32x16xbf16> to vector<32x16xbf16>
      %cst_27 = arith.constant dense<0.000000e+00> : vector<16x16xf32>
      %40 = tpu.matmul %36, %39, %cst_27 {dimension_numbers = #tpu.dot_dimension_numbers<[1], [0], [0], [1], [0, 0, 1, 1], [], []>} : vector<16x32xbf16>, vector<32x16xbf16>, vector<16x16xf32> -> vector<16x16xf32>
      %41 = arith.index_cast %arg12 : i32 to index
      %c0_28 = arith.constant 0 : index
      %c0_29 = arith.constant 0 : index
      %42 = vector.load %arg5[%41, %c0_28, %c0_29] : memref<4x32x16xbf16, #tpu.memory_space<vmem>>, vector<1x32x16xbf16>
      %43 = vector.shape_cast %42 : vector<1x32x16xbf16> to vector<32x16xbf16>
      %cst_30 = arith.constant dense<0.000000e+00> : vector<16x16xf32>
      %44 = tpu.matmul %36, %43, %cst_30 {dimension_numbers = #tpu.dot_dimension_numbers<[1], [0], [0], [1], [0, 0, 1, 1], [], []>} : vector<16x32xbf16>, vector<32x16xbf16>, vector<16x16xf32> -> vector<16x16xf32>
      %45 = arith.index_cast %arg12 : i32 to index
      %c0_31 = arith.constant 0 : index
      %c0_32 = arith.constant 0 : index
      %46 = vector.load %arg6[%45, %c0_31, %c0_32] : memref<4x32x16xbf16, #tpu.memory_space<vmem>>, vector<1x32x16xbf16>
      %47 = vector.shape_cast %46 : vector<1x32x16xbf16> to vector<32x16xbf16>
      %cst_33 = arith.constant dense<0.000000e+00> : vector<16x16xf32>
      %48 = tpu.matmul %36, %47, %cst_33 {dimension_numbers = #tpu.dot_dimension_numbers<[1], [0], [0], [1], [0, 0, 1, 1], [], []>} : vector<16x32xbf16>, vector<32x16xbf16>, vector<16x16xf32> -> vector<16x16xf32>
      %cst_34 = arith.constant 2.500000e-01 : f32
      %49 = vector.broadcast %cst_34 : f32 to vector<16x16xf32>
      %50 = arith.mulf %40, %49 : vector<16x16xf32>
      %51 = arith.truncf %50 : vector<16x16xf32> to vector<16x16xbf16>
      %52 = arith.truncf %44 : vector<16x16xf32> to vector<16x16xbf16>
      %53 = arith.truncf %48 : vector<16x16xf32> to vector<16x16xbf16>
      %cst_35 = arith.constant dense<0.000000e+00> : vector<16x16xf32>
      %54 = tpu.matmul %51, %52, %cst_35 {dimension_numbers = #tpu.dot_dimension_numbers<[1], [1], [0], [0], [0, 0, 1, 0], [], []>} : vector<16x16xbf16>, vector<16x16xbf16>, vector<16x16xf32> -> vector<16x16xf32>
      %cst_36 = arith.constant dense<0xFF800000> : vector<16xf32>
      %55 = vector.multi_reduction <maximumf>, %54, %cst_36 [1] : vector<16x16xf32> to vector<16xf32>
      %56 = vector.shape_cast %55 : vector<16xf32> to vector<16x1xf32>
      %57 = vector.broadcast %56 : vector<16x1xf32> to vector<16x16xf32>
      %58 = arith.subf %54, %57 : vector<16x16xf32>
      %59 = math.exp %58 : vector<16x16xf32>
      %cst_37 = arith.constant dense<0.000000e+00> : vector<16xf32>
      %60 = vector.multi_reduction <add>, %59, %cst_37 [1] : vector<16x16xf32> to vector<16xf32>
      %61 = vector.shape_cast %60 : vector<16xf32> to vector<16x1xf32>
      %62 = arith.truncf %59 : vector<16x16xf32> to vector<16x16xbf16>
      %cst_38 = arith.constant dense<0.000000e+00> : vector<16x16xf32>
      %63 = tpu.matmul %62, %53, %cst_38 {dimension_numbers = #tpu.dot_dimension_numbers<[1], [0], [0], [1], [0, 0, 1, 1], [], []>} : vector<16x16xbf16>, vector<16x16xbf16>, vector<16x16xf32> -> vector<16x16xf32>
      %64 = tpu.reciprocal %61 {approx = true} : vector<16x1xf32> -> vector<16x1xf32>
      %65 = vector.broadcast %64 : vector<16x1xf32> to vector<16x16xf32>
      %66 = arith.mulf %63, %65 : vector<16x16xf32>
      %c0_39 = arith.constant 0 : index
      %c0_40 = arith.constant 0 : index
      %67 = vector.load %arg11[%c0_39, %c0_40] : memref<16x32xf32, #tpu.memory_space<vmem>>, vector<16x32xf32>
      %68 = arith.truncf %66 : vector<16x16xf32> to vector<16x16xbf16>
      %69 = arith.index_cast %arg12 : i32 to index
      %c0_41 = arith.constant 0 : index
      %c0_42 = arith.constant 0 : index
      %70 = vector.load %arg7[%69, %c0_41, %c0_42] : memref<4x16x32xbf16, #tpu.memory_space<vmem>>, vector<1x16x32xbf16>
      %71 = vector.shape_cast %70 : vector<1x16x32xbf16> to vector<16x32xbf16>
      %cst_43 = arith.constant dense<0.000000e+00> : vector<16x32xf32>
      %72 = tpu.matmul %68, %71, %cst_43 {dimension_numbers = #tpu.dot_dimension_numbers<[1], [0], [0], [1], [0, 0, 1, 1], [], []>} : vector<16x16xbf16>, vector<16x32xbf16>, vector<16x32xf32> -> vector<16x32xf32>
      %73 = arith.addf %67, %72 : vector<16x32xf32>
      %c0_44 = arith.constant 0 : index
      %c0_45 = arith.constant 0 : index
      %74 = vector.load %arg11[%c0_44, %c0_45] : memref<16x32xf32, #tpu.memory_space<vmem>>, vector<16x32xf32>
      tpu.vector_store %arg11[%c0_44, %c0_45], %73 {strides = array<i32>} : memref<16x32xf32, #tpu.memory_space<vmem>>, vector<16x32xf32>,
    }
    %c4_i32_15 = arith.constant 4 : i32
    %c0_16 = arith.constant 0 : index
    %c0_17 = arith.constant 0 : index
    %29 = vector.load %arg11[%c0_16, %c0_17] : memref<16x32xf32, #tpu.memory_space<vmem>>, vector<16x32xf32>
    %c0_18 = arith.constant 0 : index
    %c0_19 = arith.constant 0 : index
    %30 = vector.load %arg8[%c0_18, %c0_19] : memref<1x32xf32, #tpu.memory_space<vmem>>, vector<1x32xf32>
    %31 = vector.broadcast %30 : vector<1x32xf32> to vector<16x32xf32>
    %32 = arith.addf %29, %31 : vector<16x32xf32>
    %c0_20 = arith.constant 0 : index
    %c0_21 = arith.constant 0 : index
    %c0_22 = arith.constant 0 : index
    %33 = vector.load %arg9[%c0_20, %c0_21, %c0_22] : memref<1x16x32xf32, #tpu.memory_space<vmem>>, vector<1x16x32xf32>
    %34 = vector.shape_cast %33 : vector<1x16x32xf32> to vector<16x32xf32>
    %35 = vector.shape_cast %32 : vector<16x32xf32> to vector<1x16x32xf32>
    tpu.vector_store %arg9[%c0_20, %c0_21, %c0_22], %35 {strides = array<i32>} : memref<1x16x32xf32, #tpu.memory_space<vmem>>, vector<1x16x32xf32>,
    return
  }
  func.func @transform_0(%arg0: i32) -> (i32, i32, i32) {
    %c0_i32 = arith.constant 0 : i32
    %c0_i32_0 = arith.constant 0 : i32
    %c0_i32_1 = arith.constant 0 : i32
    return %arg0, %c0_i32, %c0_i32_0 : i32, i32, i32
  }
  func.func @transform_1(%arg0: i32) -> (i32, i32) {
    %c0_i32 = arith.constant 0 : i32
    %c0_i32_0 = arith.constant 0 : i32
    %c0_i32_1 = arith.constant 0 : i32
    return %c0_i32, %c0_i32_0 : i32, i32
  }
  func.func @transform_2(%arg0: i32) -> (i32, i32) {
    %c0_i32 = arith.constant 0 : i32
    %c0_i32_0 = arith.constant 0 : i32
    %c0_i32_1 = arith.constant 0 : i32
    return %c0_i32, %c0_i32_0 : i32, i32
  }
  func.func @transform_3(%arg0: i32) -> (i32, i32, i32) {
    %c0_i32 = arith.constant 0 : i32
    %c0_i32_0 = arith.constant 0 : i32
    %c0_i32_1 = arith.constant 0 : i32
    %c0_i32_2 = arith.constant 0 : i32
    return %c0_i32, %c0_i32_0, %c0_i32_1 : i32, i32, i32
  }
  func.func @transform_4(%arg0: i32) -> (i32, i32, i32) {
    %c0_i32 = arith.constant 0 : i32
    %c0_i32_0 = arith.constant 0 : i32
    %c0_i32_1 = arith.constant 0 : i32
    %c0_i32_2 = arith.constant 0 : i32
    return %c0_i32, %c0_i32_0, %c0_i32_1 : i32, i32, i32
  }
  func.func @transform_5(%arg0: i32) -> (i32, i32, i32) {
    %c0_i32 = arith.constant 0 : i32
    %c0_i32_0 = arith.constant 0 : i32
    %c0_i32_1 = arith.constant 0 : i32
    %c0_i32_2 = arith.constant 0 : i32
    return %c0_i32, %c0_i32_0, %c0_i32_1 : i32, i32, i32
  }
  func.func @transform_6(%arg0: i32) -> (i32, i32, i32) {
    %c0_i32 = arith.constant 0 : i32
    %c0_i32_0 = arith.constant 0 : i32
    %c0_i32_1 = arith.constant 0 : i32
    %c0_i32_2 = arith.constant 0 : i32
    return %c0_i32, %c0_i32_0, %c0_i32_1 : i32, i32, i32
  }
  func.func @transform_7(%arg0: i32) -> (i32, i32) {
    %c0_i32 = arith.constant 0 : i32
    %c0_i32_0 = arith.constant 0 : i32
    %c0_i32_1 = arith.constant 0 : i32
    return %c0_i32, %c0_i32_0 : i32, i32
  }
  func.func @transform_8(%arg0: i32) -> (i32, i32, i32) {
    %c0_i32 = arith.constant 0 : i32
    %c0_i32_0 = arith.constant 0 : i32
    %c0_i32_1 = arith.constant 0 : i32
    return %arg0, %c0_i32, %c0_i32_0 : i32, i32, i32
  }
}

</mosaic_0001>

<llo_original>
// kernel: tpu_custom_call.1
$region0: #{tpu_custom_call.1}
  #allocation0 [shape = 'u32[]', space=smem, size = 0x4, offset = 0x4, fixed_abs, tag = 'smem constant byte address 0x4 - core index']
  #allocation1 [shape = 'u32[144,128]{1,0:T(1,128)}', space=vmem, size = 0x12000, scoped, tag = 'internal scratch']
  #allocation2 [shape = 'bf16[16,32]{1,0:T(8,128)(2,1)}', space=vmem, size = 0x1000, scoped, tag = 'scratch operand']
  #allocation3 [shape = 'f32[16,32]{1,0:T(8,128)}', space=vmem, size = 0x2000, scoped, tag = 'scratch operand']
  %s0 = inlined_call_operand.vmem [shape: f32[2,16,32], index: 0, kind: input, shape index: {}]
  %s1 = inlined_call_operand.vmem [shape: f32[1,32], index: 1, kind: input, shape index: {}]
  %s2 = inlined_call_operand.vmem [shape: f32[1,32], index: 2, kind: input, shape index: {}]
  %s3 = inlined_call_operand.vmem [shape: bf16[4,32,16], index: 3, kind: input, shape index: {}]
  %s4 = inlined_call_operand.vmem [shape: bf16[4,32,16], index: 4, kind: input, shape index: {}]
  %s5 = inlined_call_operand.vmem [shape: bf16[4,32,16], index: 5, kind: input, shape index: {}]
  %s6 = inlined_call_operand.vmem [shape: bf16[4,16,32], index: 6, kind: input, shape index: {}]
  %s7 = inlined_call_operand.vmem [shape: f32[1,32], index: 7, kind: input, shape index: {}]
  %s8 = inlined_call_operand.hbm [shape: f32[2,16,32], index: 8, kind: output, shape index: {}]
  %s9 = sld [smem:[#allocation0]]
  $region72: #{tpu_custom_call.1} parent=0
    _
  %s11 = ssub.s32 1, %s9
  %s12 = scalar_select 0, %s11, %s9
  $region1: #{tpu_custom_call.1} parent=0
    #allocation4 [shape = 'u8[16384]{0}', space=vmem, size = 0x4000, scoped, tag = 'output window, operand 0']
    #allocation5 [shape = 's32[2]{0}', space=sflag, size = 0x8, scoped, tag = 'scoped memory for tpu_custom_call.1']
    %13 = vsyncpa [#allocation5], 0
    %s14 = scalar_lea.sflag [#allocation5], 1
    %15 = vsyncpa %s14, 0
    loop: start=0, step=1, limit=4
    $region2: #{tpu_custom_call.1} parent=1 // loop_pre_header
      _
    $region3: #{tpu_custom_call.1} parent=1 // loop_header
      %s17 = sphi 0, %s21
      %p18 = scmp.ge.s32.totalorder %s17, 4
      %s27 = sphi 0, %s29
      %s30 = sphi 0, %s27
      %s31 = sphi 0, %s30
      %s47 = sphi 0, %s31
      %s51 = sphi 0, %s51
      %s53 = sphi 0, %s51
      %s54 = sphi 0, %s53
      %s68 = sphi 0, %s54
      %s72 = sphi 0, %s72
      %s74 = sphi 0, %s72
      %s75 = sphi 0, %s74
      %s89 = sphi 0, %s75
      %s93 = sphi 0, %s93
      %s95 = sphi 0, %s93
      %s96 = sphi 0, %s95
      %s110 = sphi 0, %s96
      %s114 = sphi 0, %s114
      %s116 = sphi 0, %s114
      %s117 = sphi 0, %s116
      %s131 = sphi 0, %s117
      %s135 = sphi 0, %s135
      %s137 = sphi 0, %s135
      %s138 = sphi 0, %s137
      %s152 = sphi 0, %s138
      %s156 = sphi 0, %s156
      %s158 = sphi 0, %s156
      %s159 = sphi 0, %s158
      %s173 = sphi 0, %s159
      %s177 = sphi 0, %s177
      %s179 = sphi 0, %s177
      %s180 = sphi 0, %s179
      %s194 = sphi 0, %s180
      %s200 = sphi 0, %s202
      %s203 = sphi 0, %s200
      %s204 = sphi 0, %s203
      %s220 = sphi 0, %s204
    $region4: #{tpu_custom_call.1} parent=1 // loop_header_branch
      %20 = sbr.rel (%p18) target = $region8
    $region5: #{tpu_custom_call.1} parent=1 // loop_body
      %s22 = ssub.s32 %s17, 1
      %s23 = ssub.s32 %s17, 2
      %s24 = sadd.s32 %s17, 1
      %s25 = ssub.s32 %s17, %s24
      %p26 = scmp.eq.s32.totalorder %s25, 0
      %s28 = sadd.s32 %s27, 1
      %s29 = scalar_select %p26, %s27, %s28
      %p32 = pneg %p26
      %p33 = scmp.eq.s32.totalorder %s17, 1
      %p34 = por %p32, %p33
      %p35 = scmp.ne.s32.totalorder %s27, %s30
      %p36 = scmp.eq.s32.totalorder %s17, 0
      %p37 = por %p35, %p36
      %p38 = scmp.ne.s32.totalorder %s27, %s30
      %p39 = scmp.eq.s32.totalorder %s22, 1
      %p40 = por %p38, %p39
      %p41 = scmp.ne.s32.totalorder %s30, %s31
      %p42 = scmp.eq.s32.totalorder %s22, 0
      %p43 = por %p41, %p42
      %p44 = scmp.ne.s32.totalorder %s30, %s31
      %p45 = scmp.eq.s32.totalorder %s23, 1
      %p46 = por %p44, %p45
      %p48 = scmp.ne.s32.totalorder %s31, %s47
      %p49 = scmp.eq.s32.totalorder %s23, 0
      %p50 = por %p48, %p49
      %s52 = sadd.s32 %s51, 1
      %p55 = scmp.eq.s32.totalorder %s17, 1
      %p56 = scmp.ne.s32.totalorder %s51, %s53
      %p57 = scmp.eq.s32.totalorder %s17, 0
      %p58 = por %p56, %p57
      %p59 = scmp.ne.s32.totalorder %s51, %s53
      %p60 = scmp.eq.s32.totalorder %s22, 1
      %p61 = por %p59, %p60
      %p62 = scmp.ne.s32.totalorder %s53, %s54
      %p63 = scmp.eq.s32.totalorder %s22, 0
      %p64 = por %p62, %p63
      %p65 = scmp.ne.s32.totalorder %s53, %s54
      %p66 = scmp.eq.s32.totalorder %s23, 1
      %p67 = por %p65, %p66
      %p69 = scmp.ne.s32.totalorder %s54, %s68
      %p70 = scmp.eq.s32.totalorder %s23, 0
      %p71 = por %p69, %p70
      %s73 = sadd.s32 %s72, 1
      %p76 = scmp.eq.s32.totalorder %s17, 1
      %p77 = scmp.ne.s32.totalorder %s72, %s74
      %p78 = scmp.eq.s32.totalorder %s17, 0
      %p79 = por %p77, %p78
      %p80 = scmp.ne.s32.totalorder %s72, %s74
      %p81 = scmp.eq.s32.totalorder %s22, 1
      %p82 = por %p80, %p81
      %p83 = scmp.ne.s32.totalorder %s74, %s75
      %p84 = scmp.eq.s32.totalorder %s22, 0
      %p85 = por %p83, %p84
      %p86 = scmp.ne.s32.totalorder %s74, %s75
      %p87 = scmp.eq.s32.totalorder %s23, 1
      %p88 = por %p86, %p87
      %p90 = scmp.ne.s32.totalorder %s75, %s89
      %p91 = scmp.eq.s32.totalorder %s23, 0
      %p92 = por %p90, %p91
      %s94 = sadd.s32 %s93, 1
      %p97 = scmp.eq.s32.totalorder %s17, 1
      %p98 = scmp.ne.s32.totalorder %s93, %s95
      %p99 = scmp.eq.s32.totalorder %s17, 0
      %p100 = por %p98, %p99
      %p101 = scmp.ne.s32.totalorder %s93, %s95
      %p102 = scmp.eq.s32.totalorder %s22, 1
      %p103 = por %p101, %p102
      %p104 = scmp.ne.s32.totalorder %s95, %s96
      %p105 = scmp.eq.s32.totalorder %s22, 0
      %p106 = por %p104, %p105
      %p107 = scmp.ne.s32.totalorder %s95, %s96
      %p108 = scmp.eq.s32.totalorder %s23, 1
      %p109 = por %p107, %p108
      %p111 = scmp.ne.s32.totalorder %s96, %s110
      %p112 = scmp.eq.s32.totalorder %s23, 0
      %p113 = por %p111, %p112
      %s115 = sadd.s32 %s114, 1
      %p118 = scmp.eq.s32.totalorder %s17, 1
      %p119 = scmp.ne.s32.totalorder %s114, %s116
      %p120 = scmp.eq.s32.totalorder %s17, 0
      %p121 = por %p119, %p120
      %p122 = scmp.ne.s32.totalorder %s114, %s116
      %p123 = scmp.eq.s32.totalorder %s22, 1
      %p124 = por %p122, %p123
      %p125 = scmp.ne.s32.totalorder %s116, %s117
      %p126 = scmp.eq.s32.totalorder %s22, 0
      %p127 = por %p125, %p126
      %p128 = scmp.ne.s32.totalorder %s116, %s117
      %p129 = scmp.eq.s32.totalorder %s23, 1
      %p130 = por %p128, %p129
      %p132 = scmp.ne.s32.totalorder %s117, %s131
      %p133 = scmp.eq.s32.totalorder %s23, 0
      %p134 = por %p132, %p133
      %s136 = sadd.s32 %s135, 1
      %p139 = scmp.eq.s32.totalorder %s17, 1
      %p140 = scmp.ne.s32.totalorder %s135, %s137
      %p141 = scmp.eq.s32.totalorder %s17, 0
      %p142 = por %p140, %p141
      %p143 = scmp.ne.s32.totalorder %s135, %s137
      %p144 = scmp.eq.s32.totalorder %s22, 1
      %p145 = por %p143, %p144
      %p146 = scmp.ne.s32.totalorder %s137, %s138
      %p147 = scmp.eq.s32.totalorder %s22, 0
      %p148 = por %p146, %p147
      %p149 = scmp.ne.s32.totalorder %s137, %s138
      %p150 = scmp.eq.s32.totalorder %s23, 1
      %p151 = por %p149, %p150
      %p153 = scmp.ne.s32.totalorder %s138, %s152
      %p154 = scmp.eq.s32.totalorder %s23, 0
      %p155 = por %p153, %p154
      %s157 = sadd.s32 %s156, 1
      %p160 = scmp.eq.s32.totalorder %s17, 1
      %p161 = scmp.ne.s32.totalorder %s156, %s158
      %p162 = scmp.eq.s32.totalorder %s17, 0
      %p163 = por %p161, %p162
      %p164 = scmp.ne.s32.totalorder %s156, %s158
      %p165 = scmp.eq.s32.totalorder %s22, 1
      %p166 = por %p164, %p165
      %p167 = scmp.ne.s32.totalorder %s158, %s159
      %p168 = scmp.eq.s32.totalorder %s22, 0
      %p169 = por %p167, %p168
      %p170 = scmp.ne.s32.totalorder %s158, %s159
      %p171 = scmp.eq.s32.totalorder %s23, 1
      %p172 = por %p170, %p171
      %p174 = scmp.ne.s32.totalorder %s159, %s173
      %p175 = scmp.eq.s32.totalorder %s23, 0
      %p176 = por %p174, %p175
      %s178 = sadd.s32 %s177, 1
      %p181 = scmp.eq.s32.totalorder %s17, 1
      %p182 = scmp.ne.s32.totalorder %s177, %s179
      %p183 = scmp.eq.s32.totalorder %s17, 0
      %p184 = por %p182, %p183
      %p185 = scmp.ne.s32.totalorder %s177, %s179
      %p186 = scmp.eq.s32.totalorder %s22, 1
      %p187 = por %p185, %p186
      %p188 = scmp.ne.s32.totalorder %s179, %s180
      %p189 = scmp.eq.s32.totalorder %s22, 0
      %p190 = por %p188, %p189
      %p191 = scmp.ne.s32.totalorder %s179, %s180
      %p192 = scmp.eq.s32.totalorder %s23, 1
      %p193 = por %p191, %p192
      %p195 = scmp.ne.s32.totalorder %s180, %s194
      %p196 = scmp.eq.s32.totalorder %s23, 0
      %p197 = por %p195, %p196
      %s198 = ssub.s32 %s17, %s24
      %p199 = scmp.eq.s32.totalorder %s198, 0
      %s201 = sadd.s32 %s200, 1
      %s202 = scalar_select %p199, %s200, %s201
      %p205 = pneg %p199
      %p206 = scmp.eq.s32.totalorder %s17, 1
      %p207 = por %p205, %p206
      %p208 = scmp.ne.s32.totalorder %s200, %s203
      %p209 = scmp.eq.s32.totalorder %s17, 0
      %p210 = por %p208, %p209
      %p211 = scmp.ne.s32.totalorder %s200, %s203
      %p212 = scmp.eq.s32.totalorder %s22, 1
      %p213 = por %p211, %p212
      %p214 = scmp.ne.s32.totalorder %s203, %s204
      %p215 = scmp.eq.s32.totalorder %s22, 0
      %p216 = por %p214, %p215
      %p217 = scmp.ne.s32.totalorder %s203, %s204
      %p218 = scmp.eq.s32.totalorder %s23, 1
      %p219 = por %p217, %p218
      %p221 = scmp.ne.s32.totalorder %s204, %s220
      %p222 = scmp.eq.s32.totalorder %s23, 0
      %p223 = por %p221, %p222
      %p224 = scmp.le.s32.totalorder 1, %s17
      %p225 = scmp.lt.s32.totalorder %s17, 3
      %p226 = pnand %p224, %p225
      %p227 = pneg %p226
      // Predicated region
      $region9: #{tpu_custom_call.1} parent=5 // pred_check
        _
      $region10: #{tpu_custom_call.1} parent=5 // pred_check_branch
        %229 = sbr.rel (%p226) target = $region12
      $region11: #{tpu_custom_call.1} parent=5 // pred_region
        %s230 = ssub.s32 %s17, 1
        // Predicated region
        $region13: #{tpu_custom_call.1} parent=11 // pred_check
          %p231 = pneg %p64
        $region14: #{tpu_custom_call.1} parent=11 // pred_check_branch
          %233 = sbr.rel (%p231) target = $region16
        $region15: #{tpu_custom_call.1} parent=11 // pred_region
          _
        $region16: #{tpu_custom_call.1} parent=11 // pred_fallthru
          _
        // Predicated region
        $region17: #{tpu_custom_call.1} parent=11 // pred_check
          %p234 = pneg %p85
        $region18: #{tpu_custom_call.1} parent=11 // pred_check_branch
          %236 = sbr.rel (%p234) target = $region20
        $region19: #{tpu_custom_call.1} parent=11 // pred_region
          _
        $region20: #{tpu_custom_call.1} parent=11 // pred_fallthru
          _
        // Predicated region
        $region21: #{tpu_custom_call.1} parent=11 // pred_check
          %p237 = pneg %p106
        $region22: #{tpu_custom_call.1} parent=11 // pred_check_branch
          %239 = sbr.rel (%p237) target = $region24
        $region23: #{tpu_custom_call.1} parent=11 // pred_region
          _
        $region24: #{tpu_custom_call.1} parent=11 // pred_fallthru
          _
        // Predicated region
        $region25: #{tpu_custom_call.1} parent=11 // pred_check
          %p240 = pneg %p127
        $region26: #{tpu_custom_call.1} parent=11 // pred_check_branch
          %242 = sbr.rel (%p240) target = $region28
        $region27: #{tpu_custom_call.1} parent=11 // pred_region
          _
        $region28: #{tpu_custom_call.1} parent=11 // pred_fallthru
          _
        // Predicated region
        $region29: #{tpu_custom_call.1} parent=11 // pred_check
          %p243 = pneg %p148
        $region30: #{tpu_custom_call.1} parent=11 // pred_check_branch
          %245 = sbr.rel (%p243) target = $region32
        $region31: #{tpu_custom_call.1} parent=11 // pred_region
          _
        $region32: #{tpu_custom_call.1} parent=11 // pred_fallthru
          _
        // Predicated region
        $region33: #{tpu_custom_call.1} parent=11 // pred_check
          %p246 = pneg %p169
        $region34: #{tpu_custom_call.1} parent=11 // pred_check_branch
          %248 = sbr.rel (%p246) target = $region36
        $region35: #{tpu_custom_call.1} parent=11 // pred_region
          _
        $region36: #{tpu_custom_call.1} parent=11 // pred_fallthru
          _
        // Predicated region
        $region37: #{tpu_custom_call.1} parent=11 // pred_check
          %p249 = pneg %p190
        $region38: #{tpu_custom_call.1} parent=11 // pred_check_branch
          %251 = sbr.rel (%p249) target = $region40
        $region39: #{tpu_custom_call.1} parent=11 // pred_region
          _
        $region40: #{tpu_custom_call.1} parent=11 // pred_fallthru
          _
      $region12: #{tpu_custom_call.1} parent=5 // pred_fallthru
        _
      %p252 = scmp.lt.s32.totalorder %s17, 2
      // Predicated region
      $region41: #{tpu_custom_call.1} parent=5 // pred_check
        %p253 = pneg %p252
      $region42: #{tpu_custom_call.1} parent=5 // pred_check_branch
        %255 = sbr.rel (%p253) target = $region44
      $region43: #{tpu_custom_call.1} parent=5 // pred_region
        // Predicated region
        $region45: #{tpu_custom_call.1} parent=43 // pred_check
          %p256 = pneg %p37
        $region46: #{tpu_custom_call.1} parent=43 // pred_check_branch
          %258 = sbr.rel (%p256) target = $region48
        $region47: #{tpu_custom_call.1} parent=43 // pred_region
          %p259 = scmp.lt.s32.totalorder %s17, 1
          %s260 = scalar_select %p259, %s17, 1
          %s261 = smul.addr %s260, 2
          %s262 = smul.addr %s261, 8
          %s263 = scalar_lea.vmem %s0, %s262
        $region48: #{tpu_custom_call.1} parent=43 // pred_fallthru
          _
      $region44: #{tpu_custom_call.1} parent=5 // pred_fallthru
        _
      %p264 = scmp.le.s32.totalorder 1, %s17
      %p265 = scmp.lt.s32.totalorder %s17, 3
      %p266 = pnand %p264, %p265
      %p267 = pneg %p266
      // Predicated region
      $region49: #{tpu_custom_call.1} parent=5 // pred_check
        _
      $region50: #{tpu_custom_call.1} parent=5 // pred_check_branch
        %269 = sbr.rel (%p266) target = $region52
      $region51: #{tpu_custom_call.1} parent=5 // pred_region
        %s270 = ssub.s32 %s17, 1
        %p271 = scmp.lt.s32.totalorder %s22, 1
        %s272 = scalar_select %p271, %s22, 1
        %s273 = smul.addr %s272, 2
        %s274 = smul.addr %s273, 8
        %s275 = scalar_lea.vmem %s0, %s274
        %p276 = pneg %p43
        %p277 = pneg %p40
        %p278 = pneg %p64
        %p279 = pneg %p61
        %p280 = pneg %p85
        %p281 = pneg %p82
        %p282 = pneg %p106
        %p283 = pneg %p103
        %p284 = pneg %p127
        %p285 = pneg %p124
        %p286 = pneg %p148
        %p287 = pneg %p145
        %p288 = pneg %p169
        %p289 = pneg %p166
        %p290 = pneg %p190
        %p291 = pneg %p187
        %p292 = pneg %p216
        %p293 = pneg %p213
        %s294 = sand.u32 %s203, 1
        %s295 = scalar_lea.sflag [#allocation5], %s294
        %s296 = sand.u32 %s203, 1
        %s297 = smul.addr %s296, 16
        %s298 = scalar_lea.vmem [#allocation4], %s297
        %p299 = scmp.lt.s32.totalorder %s22, 1
        %s300 = scalar_select %p299, %s22, 1
        %s301 = smul.addr %s300, 2
        %s302 = smul.addr %s301, 8
        %s303 = scalar_lea.vmem %s0, %s302
        %v305 = vld [vmem:[%s303] sm:$0xff]
        %v306 = vld [vmem:[%s303 + $0x8] sm:$0xff]
        %vm307 = vcmask 261120
        %v308 = vsel %vm307, %v305, 0.0
        %309 = vadd.xlane.f32.xlu0 %v308
        %v310 = vpop.xlane.xlu0 %309
        %v311 = vsel %vm307, %v306, 0.0
        %312 = vadd.xlane.f32.xlu0 %v311
        %v313 = vpop.xlane.xlu0 %312
        %v314 = vrcp.pop 32.0
        %v315 = vmul.f32 %v310, %v314
        %v316 = vmul.f32 %v313, %v314
        %v317 = vsub.f32 %v305, %v315
        %v318 = vsub.f32 %v306, %v316
        %v319 = vmul.f32 %v317, %v317
        %v320 = vmul.f32 %v318, %v318
        %v321 = vsel %vm307, %v319, 0.0
        %322 = vadd.xlane.f32.xlu0 %v321
        %v323 = vpop.xlane.xlu0 %322
        %v324 = vsel %vm307, %v320, 0.0
        %325 = vadd.xlane.f32.xlu0 %v324
        %v326 = vpop.xlane.xlu0 %325
        %v327 = vmul.f32 %v323, %v314
        %v328 = vmul.f32 %v326, %v314
        %v329 = vadd.f32 %v327, 1e-05
        %v330 = vadd.f32 %v328, 1e-05
        %v331 = vrsqrt.pop %v329
        %v332 = vrsqrt.pop %v330
        %v333 = vmul.f32 %v317, %v331
        %v334 = vmul.f32 %v318, %v332
        %v335 = vld [vmem:[%s1] sm:$0x1]
        %v337 = vlaneseq
        %v338 = vshrl.u32 %v337, 7
        %v339 = vsub.s32 0, %v338
        %v340 = vrot.slane %v335, %v339
        %v342 = vmul.f32 %v333, %v340
        %v343 = vmul.f32 %v334, %v340
        %v344 = vld [vmem:[%s2] sm:$0x1]
        %v346 = vlaneseq
        %v347 = vshrl.u32 %v346, 7
        %v348 = vsub.s32 0, %v347
        %v349 = vrot.slane %v344, %v348
        %v351 = vadd.f32 %v342, %v349
        %v352 = vadd.f32 %v343, %v349
        %v353 = vpack.c.bf16 %v352, %v351
        %v355 = vunpack.c.l.b16 %v353
        %v356 = vunpack.c.h.b16 %v353
        %v357 = vpack.c.b16 %v355, %v355
        %v358 = vpack.c.b16 %v356, %v356
        %vm361 = vcmask 257024
        %362 = vst.msk [vmem:[#allocation2] sm:$0xf] %vm361, %v357
        %363 = vst.msk [vmem:[#allocation2 + $0x4] sm:$0xf] %vm361, %v358
        %364 = vst.msk [vmem:[#allocation3] sm:$0xff] %vm307, 0.0
        %365 = vst.msk [vmem:[#allocation3 + $0x8] sm:$0xff] %vm307, 0.0
        loop: start=0, step=1, limit=4
        $region53: #{tpu_custom_call.1} parent=51 // loop_pre_header
          _
        $region54: #{tpu_custom_call.1} parent=51 // loop_header
          %s367 = sphi 0, %s371
          %p368 = scmp.ge.s32.totalorder %s367, 4
        $region55: #{tpu_custom_call.1} parent=51 // loop_header_branch
          %370 = sbr.rel (%p368) target = $region59
        $region56: #{tpu_custom_call.1} parent=51 // loop_body
          %v372 = vld [vmem:[#allocation2] sm:$0xf]
          %v373 = vld [vmem:[#allocation2 + $0x4] sm:$0xf]
          %s374 = smul.u32 %s367, 4
          %s375 = smul.addr %s374, 4
          %s376 = scalar_lea.vmem %s3, %s375
          %v377 = vld [vmem:[%s376] sm:$0xf]
          %v378 = vld [vmem:[%s376 + $0x4] sm:$0xf]
          %v379 = vld [vmem:[%s376 + $0x8] sm:$0xf]
          %v380 = vld [vmem:[%s376 + $0xc] sm:$0xf]
          %v383 = vunpack.c.l.b16 %v372
          %v384 = vunpack.c.l.b16 %v373
          %v385 = vpack.c.b16 %v384, %v383
          %v390 = vunpack.c.l.b16 %v377
          %v391 = vunpack.c.l.b16 %v378
          %v392 = vunpack.c.l.b16 %v379
          %v393 = vunpack.c.l.b16 %v380
          %v394 = vpack.c.b16 %v391, %v390
          %v395 = vpack.c.b16 %v393, %v392
          %v399 = vsel %vm307, %v385, 0
          %401 = vmatprep.subr.bf16.mxu0 0
          %402 = vmatpush1.bf16.msra.mxu0 0
          %403 = vmatprep.subr.bf16.mxu0 0
          %404 = vmatpush1.bf16.msra.mxu0 0
          %405 = vmatprep.subr.bf16.mxu0 0
          %406 = vmatpush1.bf16.msra.mxu0 0
          %407 = vmatprep.subr.bf16.mxu0 0
          %408 = vmatpush1.bf16.msra.mxu0 0
          %409 = vmatprep.subr.bf16.mxu0 0
          %410 = vmatpush1.bf16.msra.mxu0 0
          %411 = vmatprep.subr.bf16.mxu0 0
          %412 = vmatpush1.bf16.msra.mxu0 0
          %413 = vmatprep.subr.bf16.mxu0 0
          %414 = vmatpush1.bf16.msra.mxu0 %v395
          %415 = vmatprep.subr.bf16.mxu0 0
          %416 = vmatpush1.bf16.msra.mxu0 %v394
          %417 = vmatprep.subr.bf16.mxu0 0
          %418 = vmatpush2.bf16.msra.mxu0 0
          %419 = vmatprep.subr.bf16.mxu0 0
          %420 = vmatpush2.bf16.msra.mxu0 0
          %421 = vmatprep.subr.bf16.mxu0 0
          %422 = vmatpush2.bf16.msra.mxu0 0
          %423 = vmatprep.subr.bf16.mxu0 0
          %424 = vmatpush2.bf16.msra.mxu0 0
          %425 = vmatprep.subr.bf16.mxu0 0
          %426 = vmatpush2.bf16.msra.mxu0 0
          %427 = vmatprep.subr.bf16.mxu0 0
          %428 = vmatpush2.bf16.msra.mxu0 0
          %429 = vmatprep.subr.bf16.mxu0 0
          %430 = vmatpush2.bf16.msra.mxu0 0
          %431 = vmatprep.subr.bf16.mxu0 0
          %432 = vmatpush2.bf16.msra.mxu0 0
          %433 = vmatprep.mubr.bf16.mxu0 0
          %434 = vmatmul.mubr.bf16.gmra.mxu0 %v399
          %v435 = vpop.f32.mrf.mxu0
          %v436 = vadd.f32 0.0, %v435
          %v437 = vpop.f32.mrf.mxu0
          %v438 = vpop.f32.mrf.mxu0
          %v439 = vadd.f32 0.0, %v438
          %v440 = vpop.f32.mrf.mxu0
          %441 = vdwg.mxu0
          %s442 = smul.addr %s374, 4
          %s443 = scalar_lea.vmem %s4, %s442
          %v444 = vld [vmem:[%s443] sm:$0xf]
          %v445 = vld [vmem:[%s443 + $0x4] sm:$0xf]
          %v446 = vld [vmem:[%s443 + $0x8] sm:$0xf]
          %v447 = vld [vmem:[%s443 + $0xc] sm:$0xf]
          %v452 = vunpack.c.l.b16 %v444
          %v453 = vunpack.c.l.b16 %v445
          %v454 = vunpack.c.l.b16 %v446
          %v455 = vunpack.c.l.b16 %v447
          %v456 = vpack.c.b16 %v453, %v452
          %v457 = vpack.c.b16 %v455, %v454
          %460 = vmatprep.subr.bf16.mxu0 0
          %461 = vmatpush1.bf16.msra.mxu0 0
          %462 = vmatprep.subr.bf16.mxu0 0
          %463 = vmatpush1.bf16.msra.mxu0 0
          %464 = vmatprep.subr.bf16.mxu0 0
          %465 = vmatpush1.bf16.msra.mxu0 0
          %466 = vmatprep.subr.bf16.mxu0 0
          %467 = vmatpush1.bf16.msra.mxu0 0
          %468 = vmatprep.subr.bf16.mxu0 0
          %469 = vmatpush1.bf16.msra.mxu0 0
          %470 = vmatprep.subr.bf16.mxu0 0
          %471 = vmatpush1.bf16.msra.mxu0 0
          %472 = vmatprep.subr.bf16.mxu0 0
          %473 = vmatpush1.bf16.msra.mxu0 %v457
          %474 = vmatprep.subr.bf16.mxu0 0
          %475 = vmatpush1.bf16.msra.mxu0 %v456
          %476 = vmatprep.subr.bf16.mxu0 0
          %477 = vmatpush2.bf16.msra.mxu0 0
          %478 = vmatprep.subr.bf16.mxu0 0
          %479 = vmatpush2.bf16.msra.mxu0 0
          %480 = vmatprep.subr.bf16.mxu0 0
          %481 = vmatpush2.bf16.msra.mxu0 0
          %482 = vmatprep.subr.bf16.mxu0 0
          %483 = vmatpush2.bf16.msra.mxu0 0
          %484 = vmatprep.subr.bf16.mxu0 0
          %485 = vmatpush2.bf16.msra.mxu0 0
          %486 = vmatprep.subr.bf16.mxu0 0
          %487 = vmatpush2.bf16.msra.mxu0 0
          %488 = vmatprep.subr.bf16.mxu0 0
          %489 = vmatpush2.bf16.msra.mxu0 0
          %490 = vmatprep.subr.bf16.mxu0 0
          %491 = vmatpush2.bf16.msra.mxu0 0
          %492 = vmatprep.mubr.bf16.mxu0 0
          %493 = vmatmul.mubr.bf16.gmra.mxu0 %v399
          %v494 = vpop.f32.mrf.mxu0
          %v495 = vadd.f32 0.0, %v494
          %v496 = vpop.f32.mrf.mxu0
          %v497 = vpop.f32.mrf.mxu0
          %v498 = vadd.f32 0.0, %v497
          %v499 = vpop.f32.mrf.mxu0
          %500 = vdwg.mxu0
          %s501 = smul.addr %s374, 4
          %s502 = scalar_lea.vmem %s5, %s501
          %v503 = vld [vmem:[%s502] sm:$0xf]
          %v504 = vld [vmem:[%s502 + $0x4] sm:$0xf]
          %v505 = vld [vmem:[%s502 + $0x8] sm:$0xf]
          %v506 = vld [vmem:[%s502 + $0xc] sm:$0xf]
          %v511 = vunpack.c.l.b16 %v503
          %v512 = vunpack.c.l.b16 %v504
          %v513 = vunpack.c.l.b16 %v505
          %v514 = vunpack.c.l.b16 %v506
          %v515 = vpack.c.b16 %v512, %v511
          %v516 = vpack.c.b16 %v514, %v513
          %519 = vmatprep.subr.bf16.mxu0 0
          %520 = vmatpush1.bf16.msra.mxu0 0
          %521 = vmatprep.subr.bf16.mxu0 0
          %522 = vmatpush1.bf16.msra.mxu0 0
          %523 = vmatprep.subr.bf16.mxu0 0
          %524 = vmatpush1.bf16.msra.mxu0 0
          %525 = vmatprep.subr.bf16.mxu0 0
          %526 = vmatpush1.bf16.msra.mxu0 0
          %527 = vmatprep.subr.bf16.mxu0 0
          %528 = vmatpush1.bf16.msra.mxu0 0
          %529 = vmatprep.subr.bf16.mxu0 0
          %530 = vmatpush1.bf16.msra.mxu0 0
          %531 = vmatprep.subr.bf16.mxu0 0
          %532 = vmatpush1.bf16.msra.mxu0 %v516
          %533 = vmatprep.subr.bf16.mxu0 0
          %534 = vmatpush1.bf16.msra.mxu0 %v515
          %535 = vmatprep.subr.bf16.mxu0 0
          %536 = vmatpush2.bf16.msra.mxu0 0
          %537 = vmatprep.subr.bf16.mxu0 0
          %538 = vmatpush2.bf16.msra.mxu0 0
          %539 = vmatprep.subr.bf16.mxu0 0
          %540 = vmatpush2.bf16.msra.mxu0 0
          %541 = vmatprep.subr.bf16.mxu0 0
          %542 = vmatpush2.bf16.msra.mxu0 0
          %543 = vmatprep.subr.bf16.mxu0 0
          %544 = vmatpush2.bf16.msra.mxu0 0
          %545 = vmatprep.subr.bf16.mxu0 0
          %546 = vmatpush2.bf16.msra.mxu0 0
          %547 = vmatprep.subr.bf16.mxu0 0
          %548 = vmatpush2.bf16.msra.mxu0 0
          %549 = vmatprep.subr.bf16.mxu0 0
          %550 = vmatpush2.bf16.msra.mxu0 0
          %551 = vmatprep.mubr.bf16.mxu0 0
          %552 = vmatmul.mubr.bf16.gmra.mxu0 %v399
          %v553 = vpop.f32.mrf.mxu0
          %v554 = vadd.f32 0.0, %v553
          %v555 = vpop.f32.mrf.mxu0
          %v556 = vpop.f32.mrf.mxu0
          %v557 = vadd.f32 0.0, %v556
          %v558 = vpop.f32.mrf.mxu0
          %559 = vdwg.mxu0
          %v560 = vmul.f32 %v436, 0.25
          %v561 = vmul.f32 %v439, 0.25
          %v562 = vpack.c.bf16 %v561, %v560
          %v563 = vpack.c.bf16 %v498, %v495
          %v564 = vpack.c.bf16 %v557, %v554
          %vm565 = vcmask 130048
          %v567 = vsel %vm565, %v562, 0
          %v570 = vsel %vm565, %v563, 0
          %572 = vmatprep.subr.bf16.mxu0 0
          %573 = vmatpush1.bf16.xpose.msra.mxu0 0
          %574 = vmatprep.subr.bf16.mxu0 0
          %575 = vmatpush1.bf16.xpose.msra.mxu0 0
          %576 = vmatprep.subr.bf16.mxu0 0
          %577 = vmatpush1.bf16.xpose.msra.mxu0 0
          %578 = vmatprep.subr.bf16.mxu0 0
          %579 = vmatpush1.bf16.xpose.msra.mxu0 0
          %580 = vmatprep.subr.bf16.mxu0 0
          %581 = vmatpush1.bf16.xpose.msra.mxu0 0
          %582 = vmatprep.subr.bf16.mxu0 0
          %583 = vmatpush1.bf16.xpose.msra.mxu0 0
          %584 = vmatprep.subr.bf16.mxu0 0
          %585 = vmatpush1.bf16.xpose.msra.mxu0 0
          %586 = vmatprep.subr.bf16.mxu0 0
          %587 = vmatpush1.bf16.xpose.msra.mxu0 %v570
          %588 = vmatprep.subr.bf16.mxu0 0
          %589 = vmatpush2.bf16.xpose.msra.mxu0 0
          %590 = vmatprep.subr.bf16.mxu0 0
          %591 = vmatpush2.bf16.xpose.msra.mxu0 0
          %592 = vmatprep.subr.bf16.mxu0 0
          %593 = vmatpush2.bf16.xpose.msra.mxu0 0
          %594 = vmatprep.subr.bf16.mxu0 0
          %595 = vmatpush2.bf16.xpose.msra.mxu0 0
          %596 = vmatprep.subr.bf16.mxu0 0
          %597 = vmatpush2.bf16.xpose.msra.mxu0 0
          %598 = vmatprep.subr.bf16.mxu0 0
          %599 = vmatpush2.bf16.xpose.msra.mxu0 0
          %600 = vmatprep.subr.bf16.mxu0 0
          %601 = vmatpush2.bf16.xpose.msra.mxu0 0
          %602 = vmatprep.subr.bf16.mxu0 0
          %603 = vmatpush2.bf16.xpose.msra.mxu0 0
          %604 = vmatprep.mubr.bf16.mxu0 0
          %605 = vmatmul.mubr.bf16.gmra.mxu0 %v567
          %v606 = vpop.f32.mrf.mxu0
          %v607 = vadd.f32 0.0, %v606
          %v608 = vpop.f32.mrf.mxu0
          %v609 = vpop.f32.mrf.mxu0
          %v610 = vadd.f32 0.0, %v609
          %v611 = vpop.f32.mrf.mxu0
          %612 = vdwg.mxu0
          %v613 = vsel %vm565, %v607, -inf
          %614 = vmax.xlane.f32.xlu0 %v613
          %v615 = vpop.xlane.xlu0 %614
          %v616 = vsel %vm565, %v610, -inf
          %617 = vmax.xlane.f32.xlu0 %v616
          %v618 = vpop.xlane.xlu0 %617
          %v619 = vsub.f32 %v607, %v615
          %v620 = vsub.f32 %v610, %v618
          %v621 = vmul.f32 %v619, 1.442695
          %v622 = vpow.pop %v621
          %v623 = vmul.f32 %v620, 1.442695
          %v624 = vpow.pop %v623
          %v625 = vsel %vm565, %v622, 0.0
          %626 = vadd.xlane.f32.xlu0 %v625
          %v627 = vpop.xlane.xlu0 %626
          %v628 = vsel %vm565, %v624, 0.0
          %629 = vadd.xlane.f32.xlu0 %v628
          %v630 = vpop.xlane.xlu0 %629
          %v631 = vpack.c.bf16 %v624, %v622
          %v633 = vsel %vm565, %v631, 0
          %635 = vmatprep.subr.bf16.mxu0 0
          %636 = vmatpush1.bf16.msra.mxu0 0
          %637 = vmatprep.subr.bf16.mxu0 0
          %638 = vmatpush1.bf16.msra.mxu0 0
          %639 = vmatprep.subr.bf16.mxu0 0
          %640 = vmatpush1.bf16.msra.mxu0 0
          %641 = vmatprep.subr.bf16.mxu0 0
          %642 = vmatpush1.bf16.msra.mxu0 0
          %643 = vmatprep.subr.bf16.mxu0 0
          %644 = vmatpush1.bf16.msra.mxu0 0
          %645 = vmatprep.subr.bf16.mxu0 0
          %646 = vmatpush1.bf16.msra.mxu0 0
          %647 = vmatprep.subr.bf16.mxu0 0
          %648 = vmatpush1.bf16.msra.mxu0 0
          %649 = vmatprep.subr.bf16.mxu0 0
          %650 = vmatpush1.bf16.msra.mxu0 %v564
          %651 = vmatprep.subr.bf16.mxu0 0
          %652 = vmatpush2.bf16.msra.mxu0 0
          %653 = vmatprep.subr.bf16.mxu0 0
          %654 = vmatpush2.bf16.msra.mxu0 0
          %655 = vmatprep.subr.bf16.mxu0 0
          %656 = vmatpush2.bf16.msra.mxu0 0
          %657 = vmatprep.subr.bf16.mxu0 0
          %658 = vmatpush2.bf16.msra.mxu0 0
          %659 = vmatprep.subr.bf16.mxu0 0
          %660 = vmatpush2.bf16.msra.mxu0 0
          %661 = vmatprep.subr.bf16.mxu0 0
          %662 = vmatpush2.bf16.msra.mxu0 0
          %663 = vmatprep.subr.bf16.mxu0 0
          %664 = vmatpush2.bf16.msra.mxu0 0
          %665 = vmatprep.subr.bf16.mxu0 0
          %666 = vmatpush2.bf16.msra.mxu0 0
          %667 = vmatprep.mubr.bf16.mxu0 0
          %668 = vmatmul.mubr.bf16.gmra.mxu0 %v633
          %v669 = vpop.f32.mrf.mxu0
          %v670 = vadd.f32 0.0, %v669
          %v671 = vpop.f32.mrf.mxu0
          %v672 = vpop.f32.mrf.mxu0
          %v673 = vadd.f32 0.0, %v672
          %v674 = vpop.f32.mrf.mxu0
          %675 = vdwg.mxu0
          %v676 = vrcp.pop %v627
          %v677 = vrcp.pop %v630
          %v678 = vmul.f32 %v670, %v676
          %v679 = vmul.f32 %v673, %v677
          %v680 = vld [vmem:[#allocation3] sm:$0xff]
          %v681 = vld [vmem:[#allocation3 + $0x8] sm:$0xff]
          %v682 = vpack.c.bf16 %v679, %v678
          %s683 = smul.u32 %s367, 2
          %s684 = smul.addr %s683, 4
          %s685 = scalar_lea.vmem %s6, %s684
          %v686 = vld [vmem:[%s685] sm:$0xf]
          %v687 = vld [vmem:[%s685 + $0x4] sm:$0xf]
          %v690 = vunpack.c.l.b16 %v686
          %v691 = vunpack.c.l.b16 %v687
          %v692 = vpack.c.b16 %v691, %v690
          %v695 = vsel %vm565, %v682, 0
          %697 = vmatprep.subr.bf16.mxu0 0
          %698 = vmatpush1.bf16.msra.mxu0 0
          %699 = vmatprep.subr.bf16.mxu0 0
          %700 = vmatpush1.bf16.msra.mxu0 0
          %701 = vmatprep.subr.bf16.mxu0 0
          %702 = vmatpush1.bf16.msra.mxu0 0
          %703 = vmatprep.subr.bf16.mxu0 0
          %704 = vmatpush1.bf16.msra.mxu0 0
          %705 = vmatprep.subr.bf16.mxu0 0
          %706 = vmatpush1.bf16.msra.mxu0 0
          %707 = vmatprep.subr.bf16.mxu0 0
          %708 = vmatpush1.bf16.msra.mxu0 0
          %709 = vmatprep.subr.bf16.mxu0 0
          %710 = vmatpush1.bf16.msra.mxu0 0
          %711 = vmatprep.subr.bf16.mxu0 0
          %712 = vmatpush1.bf16.msra.mxu0 %v692
          %713 = vmatprep.subr.bf16.mxu0 0
          %714 = vmatpush2.bf16.msra.mxu0 0
          %715 = vmatprep.subr.bf16.mxu0 0
          %716 = vmatpush2.bf16.msra.mxu0 0
          %717 = vmatprep.subr.bf16.mxu0 0
          %718 = vmatpush2.bf16.msra.mxu0 0
          %719 = vmatprep.subr.bf16.mxu0 0
          %720 = vmatpush2.bf16.msra.mxu0 0
          %721 = vmatprep.subr.bf16.mxu0 0
          %722 = vmatpush2.bf16.msra.mxu0 0
          %723 = vmatprep.subr.bf16.mxu0 0
          %724 = vmatpush2.bf16.msra.mxu0 0
          %725 = vmatprep.subr.bf16.mxu0 0
          %726 = vmatpush2.bf16.msra.mxu0 0
          %727 = vmatprep.subr.bf16.mxu0 0
          %728 = vmatpush2.bf16.msra.mxu0 0
          %729 = vmatprep.mubr.bf16.mxu0 0
          %730 = vmatmul.mubr.bf16.gmra.mxu0 %v695
          %v731 = vpop.f32.mrf.mxu0
          %v732 = vadd.f32 0.0, %v731
          %v733 = vpop.f32.mrf.mxu0
          %v734 = vpop.f32.mrf.mxu0
          %v735 = vadd.f32 0.0, %v734
          %v736 = vpop.f32.mrf.mxu0
          %737 = vdwg.mxu0
          %v738 = vadd.f32 %v680, %v732
          %v739 = vadd.f32 %v681, %v735
          %740 = vst.msk [vmem:[#allocation3] sm:$0xff] %vm307, %v738
          %741 = vst.msk [vmem:[#allocation3 + $0x8] sm:$0xff] %vm307, %v739
        $region57: #{tpu_custom_call.1} parent=51 // loop_footer
          %s371 = sadd.s32 1, %s367
        $region58: #{tpu_custom_call.1} parent=51 // loop_footer_branch
          %366 = sbr.rel target = $region54
        $region59: #{tpu_custom_call.1} parent=51 // loop_exit
          _
        %v742 = vld [vmem:[#allocation3] sm:$0xff]
        %v743 = vld [vmem:[#allocation3 + $0x8] sm:$0xff]
        %v744 = vld [vmem:[%s7] sm:$0x1]
        %v746 = vlaneseq
        %v747 = vshrl.u32 %v746, 7
        %v748 = vsub.s32 0, %v747
        %v749 = vrot.slane %v744, %v748
        %v751 = vadd.f32 %v742, %v749
        %v752 = vadd.f32 %v743, %v749
        %753 = vst.msk [vmem:[%s298] sm:$0xff] %vm307, %v751
        %754 = vst.msk [vmem:[%s298 + $0x8] sm:$0xff] %vm307, %v752
        %s755 = sand.u32 %s203, 1
        %s756 = scalar_lea.sflag [#allocation5], %s755
        %s757 = sand.u32 %s203, 1
        %s758 = smul.addr %s757, 16
        %s759 = scalar_lea.vmem [#allocation4], %s758
        // Predicated region
        $region60: #{tpu_custom_call.1} parent=51 // pred_check
          %p760 = pneg %p213
        $region61: #{tpu_custom_call.1} parent=51 // pred_check_branch
          %762 = sbr.rel (%p760) target = $region63
        $region62: #{tpu_custom_call.1} parent=51 // pred_region
          %s764 = ssub.s32 256, 256
          %765 = vsyncadd %s756, %s764
          %s766 = smul.addr %s22, 2
          %s767 = smul.addr %s766, 128
          %s768 = scalar_lea.hbm %s8, %s767
          %s769 = sshll.u32 %s759, 4
          %s770 = int_to_ptr.vmem [resolvable:$true] %s769
          %775 = dma.vmem_to_hbm [thread:$0]  %s770, 256, %s768, %s756, 128, 128, 8
        $region63: #{tpu_custom_call.1} parent=51 // pred_fallthru
          _
      $region52: #{tpu_custom_call.1} parent=5 // pred_fallthru
        _
      %p776 = scmp.le.s32.totalorder 2, %s17
      // Predicated region
      $region64: #{tpu_custom_call.1} parent=5 // pred_check
        %p777 = pneg %p776
      $region65: #{tpu_custom_call.1} parent=5 // pred_check_branch
        %779 = sbr.rel (%p777) target = $region67
      $region66: #{tpu_custom_call.1} parent=5 // pred_region
        %s780 = ssub.s32 %s17, 2
        // Predicated region
        $region68: #{tpu_custom_call.1} parent=66 // pred_check
          %p781 = pneg %p219
        $region69: #{tpu_custom_call.1} parent=66 // pred_check_branch
          %783 = sbr.rel (%p781) target = $region71
        $region70: #{tpu_custom_call.1} parent=66 // pred_region
          %s784 = sand.u32 %s204, 1
          %s785 = scalar_lea.sflag [#allocation5], %s784
          %s786 = sand.u32 %s204, 1
          %s787 = smul.addr %s786, 16
          %s788 = scalar_lea.vmem [#allocation4], %s787
          %789 = dma.done %s785, 256
        $region71: #{tpu_custom_call.1} parent=66 // pred_fallthru
          _
      $region67: #{tpu_custom_call.1} parent=5 // pred_fallthru
        _
    $region6: #{tpu_custom_call.1} parent=1 // loop_footer
      %s21 = sadd.s32 1, %s17
    $region7: #{tpu_custom_call.1} parent=1 // loop_footer_branch
      %16 = sbr.rel target = $region3
    $region8: #{tpu_custom_call.1} parent=1 // loop_exit
      _
    %790 = vsyncpa [#allocation5], 1
    %s791 = scalar_lea.sflag [#allocation5], 1
    %792 = vsyncpa %s791, 1

</llo_original>
